<compile_context>
chip_gen: v6e
topology: v6e:2x2x1
jax: 0.10.0
libtpu: 0.0.40
codegen_flags: <defaults>
</compile_context>

<pallas_src>
import functools
import math

import jax
import jax.numpy as jnp
from jax import lax
from jax.experimental import pallas as pl
from jax.experimental.pallas import tpu as pltpu


def _untied_ln_affine_kernel(x_ref, w_ref, b_ref, o_ref, *, eps: float):
    # x_ref/o_ref: (ts, D) tile (batch dim squeezed); w_ref/b_ref: (ts, D).
    x = x_ref[...].astype(jnp.float32)
    mean = jnp.mean(x, axis=-1, keepdims=True)
    xc = x - mean
    var = jnp.mean(xc * xc, axis=-1, keepdims=True)      # biased var (PyTorch)
    inv = lax.rsqrt(var + eps)
    y = xc * inv
    w = w_ref[...].astype(jnp.float32)
    b = b_ref[...].astype(jnp.float32)
    o_ref[...] = (y * w + b).astype(o_ref.dtype)


def _untied_ln_kernel(x_ref, o_ref, *, eps: float):
    x = x_ref[...].astype(jnp.float32)
    mean = jnp.mean(x, axis=-1, keepdims=True)
    xc = x - mean
    var = jnp.mean(xc * xc, axis=-1, keepdims=True)
    inv = lax.rsqrt(var + eps)
    o_ref[...] = (xc * inv).astype(o_ref.dtype)


def _pick_row_tile(S: int, D: int, x_itemsize: int, w_itemsize: int,
                   affine: bool, *, budget_bytes: int = 12 << 20,
                   cap_rows: int = 1024) -> int:
    """Largest row-tile `ts` whose pipelined VMEM footprint fits the budget.

    Footprint per row of tile (conservative):
      2 buffers x (x tile + out tile)          -> 4 * D * x_itemsize
      2 buffers x (weight tile + bias tile)    -> 4 * D * w_itemsize  (affine)
    f32 intermediates live in vregs / compiler scratch (headroom left in
    vmem_limit_bytes below).
    """
    per_row = 4 * D * x_itemsize + (4 * D * w_itemsize if affine else 0)
    ts = max(1, budget_bytes // per_row)
    ts = min(ts, S, cap_rows)
    if ts < S:
        # (8, 128) constraint: second-to-last block dim must be a multiple of
        # 8 (or equal the full extent).
        ts = max(8, (ts // 8) * 8)
        ts = min(ts, S)
    return int(ts)


def untied_layer_norm(x, weight=None, bias=None, *, eps: float = 1e-5):
    """x: (..., S, D); weight/bias: (S, D) or None."""
    orig_shape = x.shape
    S, D = int(orig_shape[-2]), int(orig_shape[-1])
    B = int(math.prod(orig_shape[:-2])) if len(orig_shape) > 2 else 1
    B = max(B, 1)
    x3 = x.reshape(B, S, D)

    affine = weight is not None
    x_itemsize = jnp.dtype(x.dtype).itemsize
    w_itemsize = jnp.dtype(weight.dtype).itemsize if affine else x_itemsize

    ts = _pick_row_tile(S, D, x_itemsize, w_itemsize, affine)
    num_s = pl.cdiv(S, ts)
    grid = (num_s, B)  # batch innermost: weight/bias block resident across B

    # Kernel sees (ts, D): batch dim squeezed out of the block.
    x_spec = pl.BlockSpec((pl.Squeezed(), ts, D), lambda s, b: (b, s, 0))
    out_spec = pl.BlockSpec((pl.Squeezed(), ts, D), lambda s, b: (b, s, 0))

    # Advisory cost hint for the XLA scheduler.
    param_bytes = 2 * S * D * w_itemsize if affine else 0
    cost = pl.CostEstimate(
        flops=8 * B * S * D,
        transcendentals=B * S,
        bytes_accessed=2 * B * S * D * x_itemsize + param_bytes,
    )
    compiler_params = pltpu.CompilerParams(
        dimension_semantics=("parallel", "parallel"),
        vmem_limit_bytes=32 << 20,  # >= default on v6e/v7x, raises v5e's 16MiB
    )

    if affine:
        wb_spec = pl.BlockSpec((ts, D), lambda s, b: (s, 0))
        kernel = functools.partial(_untied_ln_affine_kernel, eps=eps)
        out = pl.pallas_call(
            kernel,
            out_shape=jax.ShapeDtypeStruct((B, S, D), x.dtype),
            grid_spec=pltpu.PrefetchScalarGridSpec(
                num_scalar_prefetch=0,
                grid=grid,
                in_specs=[x_spec, wb_spec, wb_spec],
                out_specs=out_spec,
            ),
            compiler_params=compiler_params,
            cost_estimate=cost,
        )(x3, weight, bias)
    else:
        kernel = functools.partial(_untied_ln_kernel, eps=eps)
        out = pl.pallas_call(
            kernel,
            out_shape=jax.ShapeDtypeStruct((B, S, D), x.dtype),
            grid_spec=pltpu.PrefetchScalarGridSpec(
                num_scalar_prefetch=0,
                grid=grid,
                in_specs=[x_spec],
                out_specs=out_spec,
            ),
            compiler_params=compiler_params,
            cost_estimate=cost,
        )(x3)

    return out.reshape(orig_shape)


if __name__ == "__main__":
    # Matches UntiedLayerNorm(seq_len=8, dim=32) after reset_parameters().
    B, S, D = 2, 8, 32
    eps = 1e-5

    key = jax.random.PRNGKey(0)
    x = jax.random.normal(key, (B, S, D), dtype=jnp.float32)

    weight = jnp.ones((S, D), dtype=jnp.float32)   # ones_
    bias = jnp.zeros((S, D), dtype=jnp.float32)    # zeros_

    out = untied_layer_norm(x, weight, bias, eps=eps)
    out = jax.block_until_ready(out)

    # Pure-JAX reference.
    mean = jnp.mean(x, axis=-1, keepdims=True)
    var = jnp.mean((x - mean) ** 2, axis=-1, keepdims=True)
    ref = (x - mean) / jnp.sqrt(var + eps)
    ref = ref * weight[None] + bias[None]

    assert out.shape == (B, S, D)
    assert jnp.allclose(out, ref, atol=1e-5, rtol=1e-5)

    # Also exercise the no-affine path.
    out_na = jax.block_until_ready(untied_layer_norm(x, eps=eps))
    ref_na = (x - mean) / jnp.sqrt(var + eps)
    assert jnp.allclose(out_na, ref_na, atol=1e-5, rtol=1e-5)

    print("KERNEL_OK")
</pallas_src>

<mosaic_0001>
module attributes {stable_mosaic.version = 11 : i64} {
  func.func @_untied_ln_affine_kernel(%arg0: i32, %arg1: i32, %arg2: memref<1x8x32xf32, #tpu.memory_space<vmem>>, %arg3: memref<8x32xf32, #tpu.memory_space<vmem>>, %arg4: memref<8x32xf32, #tpu.memory_space<vmem>>, %arg5: memref<1x8x32xf32, #tpu.memory_space<vmem>>) attributes {dimension_semantics = [#tpu.dimension_semantics<parallel>, #tpu.dimension_semantics<parallel>], iteration_bounds = array<i64: 1, 2>, scalar_prefetch = 0 : i64, scratch_operands = 0 : i64, tpu.core_type = #tpu.core_type<tc>, window_params = [{transform_indices = @transform_0, window_bounds = array<i64: 1, 8, 32>}, {transform_indices = @transform_1, window_bounds = array<i64: 8, 32>}, {transform_indices = @transform_2, window_bounds = array<i64: 8, 32>}, {transform_indices = @transform_3, window_bounds = array<i64: 1, 8, 32>}]} {
    %c0 = arith.constant 0 : index
    %c0_0 = arith.constant 0 : index
    %c0_1 = arith.constant 0 : index
    %0 = vector.load %arg2[%c0, %c0_0, %c0_1] : memref<1x8x32xf32, #tpu.memory_space<vmem>>, vector<1x8x32xf32>
    %1 = vector.shape_cast %0 : vector<1x8x32xf32> to vector<8x32xf32>
    %cst = arith.constant dense<0.000000e+00> : vector<8xf32>
    %2 = vector.multi_reduction <add>, %1, %cst [1] : vector<8x32xf32> to vector<8xf32>
    %3 = vector.shape_cast %2 : vector<8xf32> to vector<8x1xf32>
    %cst_2 = arith.constant 3.200000e+01 : f32
    %4 = vector.broadcast %cst_2 : f32 to vector<8x1xf32>
    %5 = arith.divf %3, %4 : vector<8x1xf32>
    %6 = vector.broadcast %5 : vector<8x1xf32> to vector<8x32xf32>
    %7 = arith.subf %1, %6 : vector<8x32xf32>
    %8 = arith.mulf %7, %7 : vector<8x32xf32>
    %cst_3 = arith.constant dense<0.000000e+00> : vector<8xf32>
    %9 = vector.multi_reduction <add>, %8, %cst_3 [1] : vector<8x32xf32> to vector<8xf32>
    %10 = vector.shape_cast %9 : vector<8xf32> to vector<8x1xf32>
    %cst_4 = arith.constant 3.200000e+01 : f32
    %11 = vector.broadcast %cst_4 : f32 to vector<8x1xf32>
    %12 = arith.divf %10, %11 : vector<8x1xf32>
    %cst_5 = arith.constant 9.99999974E-6 : f32
    %13 = vector.broadcast %cst_5 : f32 to vector<8x1xf32>
    %14 = arith.addf %12, %13 : vector<8x1xf32>
    %15 = math.rsqrt %14 : vector<8x1xf32>
    %16 = vector.broadcast %15 : vector<8x1xf32> to vector<8x32xf32>
    %17 = arith.mulf %7, %16 : vector<8x32xf32>
    %c0_6 = arith.constant 0 : index
    %c0_7 = arith.constant 0 : index
    %18 = vector.load %arg3[%c0_6, %c0_7] : memref<8x32xf32, #tpu.memory_space<vmem>>, vector<8x32xf32>
    %c0_8 = arith.constant 0 : index
    %c0_9 = arith.constant 0 : index
    %19 = vector.load %arg4[%c0_8, %c0_9] : memref<8x32xf32, #tpu.memory_space<vmem>>, vector<8x32xf32>
    %20 = arith.mulf %17, %18 : vector<8x32xf32>
    %21 = arith.addf %20, %19 : vector<8x32xf32>
    %c0_10 = arith.constant 0 : index
    %c0_11 = arith.constant 0 : index
    %c0_12 = arith.constant 0 : index
    %22 = vector.load %arg5[%c0_10, %c0_11, %c0_12] : memref<1x8x32xf32, #tpu.memory_space<vmem>>, vector<1x8x32xf32>
    %23 = vector.shape_cast %22 : vector<1x8x32xf32> to vector<8x32xf32>
    %24 = vector.shape_cast %21 : vector<8x32xf32> to vector<1x8x32xf32>
    tpu.vector_store %arg5[%c0_10, %c0_11, %c0_12], %24 {strides = array<i32>} : memref<1x8x32xf32, #tpu.memory_space<vmem>>, vector<1x8x32xf32>,
    return
  }
  func.func @transform_0(%arg0: i32, %arg1: i32) -> (i32, i32, i32) {
    %c0_i32 = arith.constant 0 : i32
    %c0_i32_0 = arith.constant 0 : i32
    return %arg1, %arg0, %c0_i32 : i32, i32, i32
  }
  func.func @transform_1(%arg0: i32, %arg1: i32) -> (i32, i32) {
    %c0_i32 = arith.constant 0 : i32
    %c0_i32_0 = arith.constant 0 : i32
    return %arg0, %c0_i32 : i32, i32
  }
  func.func @transform_2(%arg0: i32, %arg1: i32) -> (i32, i32) {
    %c0_i32 = arith.constant 0 : i32
    %c0_i32_0 = arith.constant 0 : i32
    return %arg0, %c0_i32 : i32, i32
  }
  func.func @transform_3(%arg0: i32, %arg1: i32) -> (i32, i32, i32) {
    %c0_i32 = arith.constant 0 : i32
    %c0_i32_0 = arith.constant 0 : i32
    return %arg1, %arg0, %c0_i32 : i32, i32, i32
  }
}

</mosaic_0001>

<llo_original>
// kernel: tpu_custom_call.1
$region0: #{tpu_custom_call.1}
  #allocation0 [shape = 'u32[]', space=smem, size = 0x4, offset = 0x4, fixed_abs, tag = 'smem constant byte address 0x4 - core index']
  #allocation1 [shape = 'u32[144,128]{1,0:T(1,128)}', space=vmem, size = 0x12000, scoped, tag = 'internal scratch']
  %s0 = inlined_call_operand.hbm [shape: f32[2,8,32], index: 0, kind: input, shape index: {}]
  %s1 = inlined_call_operand.hbm [shape: f32[8,32], index: 1, kind: input, shape index: {}]
  %s2 = inlined_call_operand.hbm [shape: f32[8,32], index: 2, kind: input, shape index: {}]
  %s3 = inlined_call_operand.hbm [shape: f32[2,8,32], index: 3, kind: output, shape index: {}]
  %s4 = sld [smem:[#allocation0]]
  $region57: #{tpu_custom_call.1} parent=0
    _
  %s6 = ssub.s32 1, %s4
  %s7 = scalar_select 0, %s6, %s4
  $region1: #{tpu_custom_call.1} parent=0
    #allocation2 [shape = 'u8[8192]{0}', space=vmem, size = 0x2000, scoped, tag = 'input window, operand 0']
    #allocation3 [shape = 's32[2]{0}', space=sflag, size = 0x8, scoped, tag = 'scoped memory for tpu_custom_call.1']
    #allocation4 [shape = 's32[2]{0}', space=sflag, size = 0x8, scoped, tag = 'scoped memory for tpu_custom_call.1']
    #allocation5 [shape = 'u8[4096]{0}', space=vmem, size = 0x1000, scoped, tag = 'input window, operand 1, single buffered']
    #allocation6 [shape = 's32[1]{0}', space=sflag, size = 0x4, scoped, tag = 'scoped memory for tpu_custom_call.1']
    #allocation7 [shape = 'u8[4096]{0}', space=vmem, size = 0x1000, scoped, tag = 'input window, operand 2, single buffered']
    #allocation8 [shape = 'u8[8192]{0}', space=vmem, size = 0x2000, scoped, tag = 'output window, operand 0']
    %8 = vsyncpa [#allocation3], 0
    %s9 = scalar_lea.sflag [#allocation3], 1
    %10 = vsyncpa %s9, 0
    %11 = vsyncpa [#allocation6], 0
    %12 = vsyncpa [#allocation4], 0
    %s13 = scalar_lea.sflag [#allocation4], 1
    %14 = vsyncpa %s13, 0
    loop: start=0, step=1, limit=4
    $region2: #{tpu_custom_call.1} parent=1 // loop_pre_header
      _
    $region3: #{tpu_custom_call.1} parent=1 // loop_header
      %s16 = sphi 0, %s20
      %p17 = scmp.ge.s32.totalorder %s16, 4
      %s23 = sphi 0, %s35
      %s24 = sphi 0, %s31
      %s25 = sphi 0, %s23
      %s26 = sphi 0, %s24
      %s27 = sphi 0, %s25
      %s28 = sphi 0, %s26
      %s40 = sphi 0, %s42
      %s43 = sphi 0, %s40
      %s44 = sphi 0, %s43
      %s60 = sphi 0, %s44
      %s66 = sphi 0, %s68
      %s69 = sphi 0, %s66
      %s70 = sphi 0, %s69
      %s86 = sphi 0, %s70
      %s92 = sphi 0, %s94
      %s95 = sphi 0, %s92
      %s96 = sphi 0, %s95
      %s112 = sphi 0, %s96
      %s120 = sphi 0, %s122
      %s123 = sphi 0, %s120
      %s124 = sphi 0, %s123
      %s140 = sphi 0, %s124
    $region4: #{tpu_custom_call.1} parent=1 // loop_header_branch
      %19 = sbr.rel (%p17) target = $region8
    $region5: #{tpu_custom_call.1} parent=1 // loop_body
      %s21 = ssub.s32 %s16, 1
      %s22 = ssub.s32 %s16, 2
      %s29 = sadd.s32 1, %s24
      %p30 = scmp.ge.s32.totalorder %s29, 2
      %s31 = scalar_select %p30, 0, %s29
      %s32 = sadd.s32 1, %s23
      %s33 = scalar_select %p30, %s32, %s23
      %p34 = scmp.ge.s32.totalorder %s33, 1
      %s35 = scalar_select %p34, 0, %s33
      %s36 = ssub.s32 %s24, %s31
      %s37 = ssub.s32 %s23, %s35
      %s38 = sor.u32 %s36, %s37
      %p39 = scmp.eq.s32.totalorder %s38, 0
      %s41 = sadd.s32 %s40, 1
      %s42 = scalar_select %p39, %s40, %s41
      %p45 = pneg %p39
      %p46 = scmp.eq.s32.totalorder %s16, 1
      %p47 = por %p45, %p46
      %p48 = scmp.ne.s32.totalorder %s40, %s43
      %p49 = scmp.eq.s32.totalorder %s16, 0
      %p50 = por %p48, %p49
      %p51 = scmp.ne.s32.totalorder %s40, %s43
      %p52 = scmp.eq.s32.totalorder %s21, 1
      %p53 = por %p51, %p52
      %p54 = scmp.ne.s32.totalorder %s43, %s44
      %p55 = scmp.eq.s32.totalorder %s21, 0
      %p56 = por %p54, %p55
      %p57 = scmp.ne.s32.totalorder %s43, %s44
      %p58 = scmp.eq.s32.totalorder %s22, 1
      %p59 = por %p57, %p58
      %p61 = scmp.ne.s32.totalorder %s44, %s60
      %p62 = scmp.eq.s32.totalorder %s22, 0
      %p63 = por %p61, %p62
      %s64 = ssub.s32 %s23, %s35
      %p65 = scmp.eq.s32.totalorder %s64, 0
      %s67 = sadd.s32 %s66, 1
      %s68 = scalar_select %p65, %s66, %s67
      %p71 = pneg %p65
      %p72 = scmp.eq.s32.totalorder %s16, 1
      %p73 = por %p71, %p72
      %p74 = scmp.ne.s32.totalorder %s66, %s69
      %p75 = scmp.eq.s32.totalorder %s16, 0
      %p76 = por %p74, %p75
      %p77 = scmp.ne.s32.totalorder %s66, %s69
      %p78 = scmp.eq.s32.totalorder %s21, 1
      %p79 = por %p77, %p78
      %p80 = scmp.ne.s32.totalorder %s69, %s70
      %p81 = scmp.eq.s32.totalorder %s21, 0
      %p82 = por %p80, %p81
      %p83 = scmp.ne.s32.totalorder %s69, %s70
      %p84 = scmp.eq.s32.totalorder %s22, 1
      %p85 = por %p83, %p84
      %p87 = scmp.ne.s32.totalorder %s70, %s86
      %p88 = scmp.eq.s32.totalorder %s22, 0
      %p89 = por %p87, %p88
      %s90 = ssub.s32 %s23, %s35
      %p91 = scmp.eq.s32.totalorder %s90, 0
      %s93 = sadd.s32 %s92, 1
      %s94 = scalar_select %p91, %s92, %s93
      %p97 = pneg %p91
      %p98 = scmp.eq.s32.totalorder %s16, 1
      %p99 = por %p97, %p98
      %p100 = scmp.ne.s32.totalorder %s92, %s95
      %p101 = scmp.eq.s32.totalorder %s16, 0
      %p102 = por %p100, %p101
      %p103 = scmp.ne.s32.totalorder %s92, %s95
      %p104 = scmp.eq.s32.totalorder %s21, 1
      %p105 = por %p103, %p104
      %p106 = scmp.ne.s32.totalorder %s95, %s96
      %p107 = scmp.eq.s32.totalorder %s21, 0
      %p108 = por %p106, %p107
      %p109 = scmp.ne.s32.totalorder %s95, %s96
      %p110 = scmp.eq.s32.totalorder %s22, 1
      %p111 = por %p109, %p110
      %p113 = scmp.ne.s32.totalorder %s96, %s112
      %p114 = scmp.eq.s32.totalorder %s22, 0
      %p115 = por %p113, %p114
      %s116 = ssub.s32 %s24, %s31
      %s117 = ssub.s32 %s23, %s35
      %s118 = sor.u32 %s116, %s117
      %p119 = scmp.eq.s32.totalorder %s118, 0
      %s121 = sadd.s32 %s120, 1
      %s122 = scalar_select %p119, %s120, %s121
      %p125 = pneg %p119
      %p126 = scmp.eq.s32.totalorder %s16, 1
      %p127 = por %p125, %p126
      %p128 = scmp.ne.s32.totalorder %s120, %s123
      %p129 = scmp.eq.s32.totalorder %s16, 0
      %p130 = por %p128, %p129
      %p131 = scmp.ne.s32.totalorder %s120, %s123
      %p132 = scmp.eq.s32.totalorder %s21, 1
      %p133 = por %p131, %p132
      %p134 = scmp.ne.s32.totalorder %s123, %s124
      %p135 = scmp.eq.s32.totalorder %s21, 0
      %p136 = por %p134, %p135
      %p137 = scmp.ne.s32.totalorder %s123, %s124
      %p138 = scmp.eq.s32.totalorder %s22, 1
      %p139 = por %p137, %p138
      %p141 = scmp.ne.s32.totalorder %s124, %s140
      %p142 = scmp.eq.s32.totalorder %s22, 0
      %p143 = por %p141, %p142
      %p144 = scmp.le.s32.totalorder 1, %s16
      %p145 = scmp.lt.s32.totalorder %s16, 3
      %p146 = pnand %p144, %p145
      %p147 = pneg %p146
      // Predicated region
      $region9: #{tpu_custom_call.1} parent=5 // pred_check
        _
      $region10: #{tpu_custom_call.1} parent=5 // pred_check_branch
        %149 = sbr.rel (%p146) target = $region12
      $region11: #{tpu_custom_call.1} parent=5 // pred_region
        %s150 = ssub.s32 %s16, 1
        // Predicated region
        $region13: #{tpu_custom_call.1} parent=11 // pred_check
          %p151 = pneg %p82
        $region14: #{tpu_custom_call.1} parent=11 // pred_check_branch
          %153 = sbr.rel (%p151) target = $region16
        $region15: #{tpu_custom_call.1} parent=11 // pred_region
          %s155 = ssub.s32 128, 128
          %156 = vsyncadd [#allocation6], %s155
          %s157 = smul.addr %s25, 128
          %s158 = scalar_lea.hbm %s1, %s157
          %s160 = sshll.u32 [#allocation5], 4
          %s161 = int_to_ptr.vmem [resolvable:$true] %s160
          %163 = dma.hbm_to_vmem [thread:$0]  %s158, 128, %s161, [#allocation6]
        $region16: #{tpu_custom_call.1} parent=11 // pred_fallthru
          _
        // Predicated region
        $region17: #{tpu_custom_call.1} parent=11 // pred_check
          %p164 = pneg %p108
        $region18: #{tpu_custom_call.1} parent=11 // pred_check_branch
          %166 = sbr.rel (%p164) target = $region20
        $region19: #{tpu_custom_call.1} parent=11 // pred_region
          %s168 = ssub.s32 128, 128
          %169 = vsyncadd [#allocation6], %s168
          %s170 = smul.addr %s25, 128
          %s171 = scalar_lea.hbm %s2, %s170
          %s173 = sshll.u32 [#allocation7], 4
          %s174 = int_to_ptr.vmem [resolvable:$true] %s173
          %176 = dma.hbm_to_vmem [thread:$0]  %s171, 128, %s174, [#allocation6]
        $region20: #{tpu_custom_call.1} parent=11 // pred_fallthru
          _
      $region12: #{tpu_custom_call.1} parent=5 // pred_fallthru
        _
      %p177 = scmp.lt.s32.totalorder %s16, 2
      // Predicated region
      $region21: #{tpu_custom_call.1} parent=5 // pred_check
        %p178 = pneg %p177
      $region22: #{tpu_custom_call.1} parent=5 // pred_check_branch
        %180 = sbr.rel (%p178) target = $region24
      $region23: #{tpu_custom_call.1} parent=5 // pred_region
        // Predicated region
        $region25: #{tpu_custom_call.1} parent=23 // pred_check
          %p181 = pneg %p50
        $region26: #{tpu_custom_call.1} parent=23 // pred_check_branch
          %183 = sbr.rel (%p181) target = $region28
        $region27: #{tpu_custom_call.1} parent=23 // pred_region
          %s184 = sand.u32 %s40, 1
          %s185 = scalar_lea.sflag [#allocation3], %s184
          %s186 = sand.u32 %s40, 1
          %s187 = smul.addr %s186, 8
          %s188 = scalar_lea.vmem [#allocation2], %s187
          %s190 = ssub.s32 128, 128
          %191 = vsyncadd %s185, %s190
          %s192 = sadd.s32 %s23, %s24
          %s193 = smul.addr %s192, 128
          %s194 = scalar_lea.hbm %s0, %s193
          %s196 = sshll.u32 %s188, 4
          %s197 = int_to_ptr.vmem [resolvable:$true] %s196
          %199 = dma.hbm_to_vmem [thread:$0]  %s194, 128, %s197, %s185
        $region28: #{tpu_custom_call.1} parent=23 // pred_fallthru
          _
      $region24: #{tpu_custom_call.1} parent=5 // pred_fallthru
        _
      %p200 = scmp.le.s32.totalorder 1, %s16
      %p201 = scmp.lt.s32.totalorder %s16, 3
      %p202 = pnand %p200, %p201
      %p203 = pneg %p202
      // Predicated region
      $region29: #{tpu_custom_call.1} parent=5 // pred_check
        _
      $region30: #{tpu_custom_call.1} parent=5 // pred_check_branch
        %205 = sbr.rel (%p202) target = $region32
      $region31: #{tpu_custom_call.1} parent=5 // pred_region
        %s206 = ssub.s32 %s16, 1
        %s207 = sand.u32 %s43, 1
        %s208 = scalar_lea.sflag [#allocation3], %s207
        %s209 = sand.u32 %s43, 1
        %s210 = smul.addr %s209, 8
        %s211 = scalar_lea.vmem [#allocation2], %s210
        // Predicated region
        $region33: #{tpu_custom_call.1} parent=31 // pred_check
          %p212 = pneg %p56
        $region34: #{tpu_custom_call.1} parent=31 // pred_check_branch
          %214 = sbr.rel (%p212) target = $region36
        $region35: #{tpu_custom_call.1} parent=31 // pred_region
          %215 = dma.done %s208, 128
        $region36: #{tpu_custom_call.1} parent=31 // pred_fallthru
          _
        // Predicated region
        $region37: #{tpu_custom_call.1} parent=31 // pred_check
          %p216 = pneg %p82
        $region38: #{tpu_custom_call.1} parent=31 // pred_check_branch
          %218 = sbr.rel (%p216) target = $region40
        $region39: #{tpu_custom_call.1} parent=31 // pred_region
          %219 = dma.done [#allocation6], 128
        $region40: #{tpu_custom_call.1} parent=31 // pred_fallthru
          _
        // Predicated region
        $region41: #{tpu_custom_call.1} parent=31 // pred_check
          %p220 = pneg %p108
        $region42: #{tpu_custom_call.1} parent=31 // pred_check_branch
          %222 = sbr.rel (%p220) target = $region44
        $region43: #{tpu_custom_call.1} parent=31 // pred_region
          %223 = dma.done [#allocation6], 128
        $region44: #{tpu_custom_call.1} parent=31 // pred_fallthru
          _
        %s224 = sand.u32 %s43, 1
        %s225 = scalar_lea.sflag [#allocation3], %s224
        %s226 = sand.u32 %s43, 1
        %s227 = smul.addr %s226, 8
        %s228 = scalar_lea.vmem [#allocation2], %s227
        %p229 = pneg %p56
        %p230 = pneg %p53
        %p231 = pneg %p82
        %p232 = pneg %p79
        %p233 = pneg %p108
        %p234 = pneg %p105
        %p235 = pneg %p136
        %p236 = pneg %p133
        %s237 = sand.u32 %s123, 1
        %s238 = scalar_lea.sflag [#allocation4], %s237
        %s239 = sand.u32 %s123, 1
        %s240 = smul.addr %s239, 8
        %s241 = scalar_lea.vmem [#allocation8], %s240
        %v242 = vld [vmem:[%s211] sm:$0xff]
        %vm243 = vcmask 261120
        %v244 = vsel %vm243, %v242, 0.0
        %245 = vadd.xlane.f32.xlu0 %v244
        %v246 = vpop.xlane.xlu0 %245
        %v247 = vrcp.pop 32.0
        %v248 = vmul.f32 %v246, %v247
        %v249 = vsub.f32 %v242, %v248
        %v250 = vmul.f32 %v249, %v249
        %v251 = vsel %vm243, %v250, 0.0
        %252 = vadd.xlane.f32.xlu0 %v251
        %v253 = vpop.xlane.xlu0 %252
        %v254 = vmul.f32 %v253, %v247
        %v255 = vadd.f32 %v254, 1e-05
        %v256 = vrsqrt.pop %v255
        %v257 = vmul.f32 %v249, %v256
        %v258 = vld [vmem:[#allocation5] sm:$0xff]
        %v259 = vld [vmem:[#allocation7] sm:$0xff]
        %v260 = vmul.f32 %v257, %v258
        %v261 = vadd.f32 %v260, %v259
        %262 = vst.msk [vmem:[%s241] sm:$0xff] %vm243, %v261
        %s263 = sand.u32 %s123, 1
        %s264 = scalar_lea.sflag [#allocation4], %s263
        %s265 = sand.u32 %s123, 1
        %s266 = smul.addr %s265, 8
        %s267 = scalar_lea.vmem [#allocation8], %s266
        // Predicated region
        $region45: #{tpu_custom_call.1} parent=31 // pred_check
          %p268 = pneg %p133
        $region46: #{tpu_custom_call.1} parent=31 // pred_check_branch
          %270 = sbr.rel (%p268) target = $region48
        $region47: #{tpu_custom_call.1} parent=31 // pred_region
          %s272 = ssub.s32 128, 128
          %273 = vsyncadd %s264, %s272
          %s274 = sadd.s32 %s25, %s26
          %s275 = smul.addr %s274, 128
          %s276 = scalar_lea.hbm %s3, %s275
          %s278 = sshll.u32 %s267, 4
          %s279 = int_to_ptr.vmem [resolvable:$true] %s278
          %281 = dma.vmem_to_hbm [thread:$0]  %s279, 128, %s276, %s264
        $region48: #{tpu_custom_call.1} parent=31 // pred_fallthru
          _
      $region32: #{tpu_custom_call.1} parent=5 // pred_fallthru
        _
      %p282 = scmp.le.s32.totalorder 2, %s16
      // Predicated region
      $region49: #{tpu_custom_call.1} parent=5 // pred_check
        %p283 = pneg %p282
      $region50: #{tpu_custom_call.1} parent=5 // pred_check_branch
        %285 = sbr.rel (%p283) target = $region52
      $region51: #{tpu_custom_call.1} parent=5 // pred_region
        %s286 = ssub.s32 %s16, 2
        // Predicated region
        $region53: #{tpu_custom_call.1} parent=51 // pred_check
          %p287 = pneg %p139
        $region54: #{tpu_custom_call.1} parent=51 // pred_check_branch
          %289 = sbr.rel (%p287) target = $region56
        $region55: #{tpu_custom_call.1} parent=51 // pred_region
          %s290 = sand.u32 %s124, 1
          %s291 = scalar_lea.sflag [#allocation4], %s290
          %s292 = sand.u32 %s124, 1
          %s293 = smul.addr %s292, 8
          %s294 = scalar_lea.vmem [#allocation8], %s293
          %295 = dma.done %s291, 128
        $region56: #{tpu_custom_call.1} parent=51 // pred_fallthru
          _
      $region52: #{tpu_custom_call.1} parent=5 // pred_fallthru
        _
    $region6: #{tpu_custom_call.1} parent=1 // loop_footer
      %s20 = sadd.s32 1, %s16
    $region7: #{tpu_custom_call.1} parent=1 // loop_footer_branch
      %15 = sbr.rel target = $region3
    $region8: #{tpu_custom_call.1} parent=1 // loop_exit
      _
    %296 = vsyncpa [#allocation3], 1
    %s297 = scalar_lea.sflag [#allocation3], 1
    %298 = vsyncpa %s297, 1
    %299 = vsyncpa [#allocation6], 1
    %300 = vsyncpa [#allocation4], 1
    %s301 = scalar_lea.sflag [#allocation4], 1
    %302 = vsyncpa %s301, 1

</llo_original>
